<compile_context>
chip_gen: v5e
topology: v5e:2x2
jax: 0.10.0
libtpu: 0.0.40
codegen_flags: <defaults>
</compile_context>

<pallas_src>
import functools

import jax
import jax.numpy as jnp
from jax.experimental import pallas as pl
from jax.experimental.pallas import tpu as pltpu

DICE = True          # stand-in for config.DICE (both branches implemented)
_EPS = 1e-7
_LANE = 128
_PAD_LOGIT = -1e9    # sigmoid(pad)=0 -> contributes 0 to dice and BCE (do NOT use -inf)


def _multitask_loss_kernel(pm_ref, t_ref, lab_ref, label_ref, its_ref, inten_ref,
                           out_ref, acc_a_ref, acc_b_ref, *,
                           use_dice: bool, n_rows: int, tile_rows: int,
                           inner_steps: int, batch: int, ragged: bool):
    c = pl.program_id(0)          # core-split axis ("parallel")
    i = pl.program_id(1)          # streaming / reduction axis ("arbitrary")

    # ---- per-core-pass init --------------------------------------------------
    @pl.when(i == 0)
    def _init():
        acc_a_ref[...] = jnp.zeros_like(acc_a_ref)
        acc_b_ref[...] = jnp.zeros_like(acc_b_ref)

    # ---- per-tile accumulate: per-lane partials (VALU adds + 1 sublane reduce) -
    def _accum(valid):
        pm = pm_ref[...].astype(jnp.float32)     # (tile_rows, 128) logits
        t = t_ref[...].astype(jnp.float32)       # (tile_rows, 128) binary mask {0,1}
        if use_dice:
            p = 0.5 * (1.0 + jnp.tanh(0.5 * pm))          # sigmoid, single EUP push
            q_pt = p * t
            q_card = p + t
            if valid is not None:
                q_pt = jnp.where(valid, q_pt, 0.0)        # select: garbage-safe
                q_card = jnp.where(valid, q_card, 0.0)
            acc_a_ref[...] += jnp.sum(q_pt, axis=0, keepdims=True)
            acc_b_ref[...] += jnp.sum(q_card, axis=0, keepdims=True)
        else:
            # BCEWithLogitsLoss elementwise term, numerically-stable log1p form.
            elem = jnp.maximum(pm, 0.0) - pm * t + jnp.log1p(jnp.exp(-jnp.abs(pm)))
            if valid is not None:
                elem = jnp.where(valid, elem, 0.0)
            acc_a_ref[...] += jnp.sum(elem, axis=0, keepdims=True)

    if ragged:
        block_idx = c * inner_steps + i                   # logical block (may be OOB)
        row0 = block_idx * tile_rows
        is_partial = row0 + tile_rows > n_rows            # runs masked path at most
                                                          # once per core
        @pl.when(jnp.logical_not(is_partial))
        def _full_tile():
            _accum(None)

        @pl.when(is_partial)
        def _partial_tile():
            grow = row0 + jax.lax.broadcasted_iota(jnp.int32, (tile_rows, _LANE), 0)
            _accum(grow < n_rows)
    else:
        _accum(None)

    # ---- finalize: emit per-core partials + tiny label-CE / intensity-BCE -----
    @pl.when(i == inner_steps - 1)
    def _finalize():
        # Label cross-entropy numerator (mean over batch). Both cores compute the
        # same value into their own output block; the wrapper reads core 0's copy.
        logits = lab_ref[...].astype(jnp.float32)                     # (B, C)
        m = jnp.max(logits, axis=-1, keepdims=True)
        lse = m + jnp.log(jnp.sum(jnp.exp(logits - m), axis=-1, keepdims=True))
        onehot = (jax.lax.broadcasted_iota(jnp.int32, logits.shape, 1)
                  == label_ref[...]).astype(jnp.float32)
        picked = jnp.sum(onehot * logits, axis=-1, keepdims=True)
        lab_loss = jnp.sum(lse - picked) / float(batch)

        # Intensity BCE-with-logits (mean over batch).
        x = its_ref[...].astype(jnp.float32)                          # (B, 1)
        y = inten_ref[...].astype(jnp.float32)                        # (B, 1)
        its_loss = jnp.sum(jnp.maximum(x, 0.0) - x * y
                           + jnp.log1p(jnp.exp(-jnp.abs(x)))) / float(batch)

        blk = jnp.concatenate([
            acc_a_ref[...],                                 # row 0: per-lane sum(p*t) / BCE sum
            acc_b_ref[...],                                 # row 1: per-lane sum(p+t)
            jnp.full((1, _LANE), lab_loss, jnp.float32),    # row 2: label CE
            jnp.full((1, _LANE), its_loss, jnp.float32),    # row 3: intensity BCE
            jnp.zeros((4, _LANE), jnp.float32),
        ], axis=0)                                          # (8, 128)
        out_ref[...] = blk[None]                            # (1, 8, 128) per-core block


def multitask_loss(pred_mask, pred_lab, pred_its, mask, label, intensity, *,
                   use_dice=DICE, max_tile_rows=None, block_bytes=2 * 1024 * 1024):
    """preds = (pred_mask [B,1,H,W], pred_lab [B,C], pred_its [B,1]);
       mask [B,1,H,W]; label [B] int; intensity [B]. Returns shape (3,) f32."""
    B, C = pred_lab.shape
    numel = int(pred_mask.size)

    pm_flat = pred_mask.reshape(-1)           # free reshape; native dtype (bf16 stays bf16)
    t_flat = mask.reshape(-1)

    tail_pm = tail_t = None
    if numel % _LANE == 0:
        rows = numel // _LANE
        pm2d = pm_flat.reshape(rows, _LANE)                 # zero-copy lane-dense view
        t2d = t_flat.reshape(rows, _LANE)
    elif numel > _LANE:
        # TODO(synk): the prefix slice may still copy the prefix in XLA; a fully
        # copy-free ragged tail would need 1-D blocks or a manual-DMA (pl.ANY) path.
        n_prefix = (numel // _LANE) * _LANE
        rows = n_prefix // _LANE
        pm2d = jax.lax.slice(pm_flat, (0,), (n_prefix,)).reshape(rows, _LANE)
        t2d = jax.lax.slice(t_flat, (0,), (n_prefix,)).reshape(rows, _LANE)
        tail_pm = jax.lax.slice(pm_flat, (n_prefix,), (numel,)).astype(jnp.float32)
        tail_t = jax.lax.slice(t_flat, (n_prefix,), (numel,)).astype(jnp.float32)
    else:
        # Degenerate (< 128 elements): pad one lane row; pad logits contribute exactly 0.
        pad = _LANE - numel
        pm2d = jnp.pad(pm_flat, (0, pad), constant_values=_PAD_LOGIT).reshape(1, _LANE)
        t2d = jnp.pad(t_flat, (0, pad), constant_values=0).reshape(1, _LANE)
        rows = 1

    # Tile rows: ~block_bytes per stream buffer (4096 f32 / 8192 bf16 by default);
    # 2 streams x 2 pipeline buffers ~= 8 MiB VMEM, >= 4 MiB HBM traffic per grid step.
    itemsize = max(jnp.dtype(pred_mask.dtype).itemsize, jnp.dtype(mask.dtype).itemsize)
    tile_rows = max(16, (int(block_bytes) // (_LANE * itemsize) // 16) * 16)
    if max_tile_rows is not None:
        tile_rows = max(16, (min(tile_rows, int(max_tile_rows)) // 16) * 16)
    if rows <= tile_rows:
        tile_rows = rows                       # single full block (always layout-legal)
    n_blocks = pl.cdiv(rows, tile_rows)

    # Two-way row split on a leading "parallel" axis -> both TensorCores on v7x.
    n_split = 2 if n_blocks >= 2 else 1
    inner_steps = pl.cdiv(n_blocks, n_split)
    has_oob = n_split * inner_steps != n_blocks           # at most one wasted step
    ragged = has_oob or (rows % tile_rows != 0)

    if has_oob:
        stream_map = lambda c, i: (jnp.minimum(c * inner_steps + i, n_blocks - 1), 0)
    else:
        stream_map = lambda c, i: (c * inner_steps + i, 0)
    const_map = lambda c, i: (0, 0)            # tiny tensors: DMA'd once per core

    label2d = label.astype(jnp.int32).reshape(B, 1)
    its2d = pred_its.reshape(B, 1)
    inten2d = intensity.astype(jnp.float32).reshape(B, 1)   # unsqueeze(1)

    kernel = functools.partial(
        _multitask_loss_kernel,
        use_dice=use_dice, n_rows=rows, tile_rows=tile_rows,
        inner_steps=inner_steps, batch=B, ragged=ragged)

    out = pl.pallas_call(
        kernel,
        out_shape=jax.ShapeDtypeStruct((n_split, 8, _LANE), jnp.float32),
        grid=(n_split, inner_steps),
        in_specs=[
            pl.BlockSpec((tile_rows, _LANE), stream_map),   # pred-mask logits stream
            pl.BlockSpec((tile_rows, _LANE), stream_map),   # target mask stream
            pl.BlockSpec((B, C), const_map),                # label logits
            pl.BlockSpec((B, 1), const_map),                # int32 labels
            pl.BlockSpec((B, 1), const_map),                # intensity logits
            pl.BlockSpec((B, 1), const_map),                # intensity targets
        ],
        out_specs=pl.BlockSpec((1, 8, _LANE), lambda c, i: (c, 0, 0)),
        scratch_shapes=[pltpu.VMEM((1, _LANE), jnp.float32),
                        pltpu.VMEM((1, _LANE), jnp.float32)],
        compiler_params=pltpu.CompilerParams(
            dimension_semantics=("parallel", "arbitrary"),
            vmem_limit_bytes=32 * 1024 * 1024),
    )(pm2d, t2d, pred_lab, label2d, its2d, inten2d)

    # ---- finalize (~20 flops) in the wrapper: combine per-core partials + tail ----
    n = float(numel)
    if use_dice:
        s_pt = jnp.sum(out[:, 0, :])
        s_card = jnp.sum(out[:, 1, :])
        if tail_pm is not None:
            p_tail = jax.nn.sigmoid(tail_pm)
            s_pt = s_pt + jnp.sum(p_tail * tail_t)
            s_card = s_card + jnp.sum(p_tail + tail_t)
        inter0, card0 = s_pt, s_card                       # channel 0: (p, t)
        inter1 = n - s_card + s_pt                         # channel 1: (1-p, 1-t)
        card1 = 2.0 * n - s_card
        dice = 0.5 * (2.0 * inter0 / (card0 + _EPS) + 2.0 * inter1 / (card1 + _EPS))
        seg_loss = 1.0 - dice
    else:
        s_elem = jnp.sum(out[:, 0, :])
        if tail_pm is not None:
            s_elem = s_elem + jnp.sum(jnp.maximum(tail_pm, 0.0) - tail_pm * tail_t
                                      + jnp.log1p(jnp.exp(-jnp.abs(tail_pm))))
        seg_loss = s_elem / n

    lab_loss = out[0, 2, 0]
    its_loss = out[0, 3, 0]
    # torch.stack([segLoss, labLoss, itsLoss])
    return jnp.stack([seg_loss, lab_loss, its_loss])


def multitask_loss_ref(pred_mask, pred_lab, pred_its, mask, label, intensity, *, use_dice=DICE):
    """Pure-JAX reference mirroring the PyTorch forward, for validation."""
    pm = pred_mask.astype(jnp.float32)
    t = mask.astype(jnp.float32)
    if use_dice:
        p = jax.nn.sigmoid(pm)
        probas = jnp.concatenate([p, 1.0 - p], axis=1)
        t1h = jnp.concatenate([t, 1.0 - t], axis=1)
        inter = jnp.sum(probas * t1h, axis=(0, 2, 3))
        card = jnp.sum(probas + t1h, axis=(0, 2, 3))
        seg = 1.0 - jnp.mean(2.0 * inter / (card + _EPS))
    else:
        seg = jnp.mean(jnp.maximum(pm, 0.0) - pm * t + jnp.log1p(jnp.exp(-jnp.abs(pm))))
    logits = pred_lab.astype(jnp.float32)
    lse = jax.scipy.special.logsumexp(logits, axis=-1)
    ce = jnp.mean(lse - logits[jnp.arange(logits.shape[0]), label])
    x = pred_its.astype(jnp.float32)
    y = intensity.astype(jnp.float32).reshape(-1, 1)
    bce = jnp.mean(jnp.maximum(x, 0.0) - x * y + jnp.log1p(jnp.exp(-jnp.abs(x))))
    return jnp.stack([seg, ce, bce])


if __name__ == "__main__":
    key = jax.random.PRNGKey(0)
    cases = [
        # (B, C, H, W, mask dtype, use_dice, max_tile_rows)
        dict(B=2, C=4, H=16, W=16, dtype=jnp.float32,  use_dice=True,  tile=None),  # single tile
        dict(B=2, C=4, H=16, W=16, dtype=jnp.float32,  use_dice=False, tile=None),  # BCE seg branch
        dict(B=2, C=4, H=48, W=56, dtype=jnp.float32,  use_dice=True,  tile=16),    # 2-core split, ragged + OOB tile
        dict(B=2, C=3, H=30, W=30, dtype=jnp.float32,  use_dice=False, tile=None),  # lane-tail (numel % 128 != 0)
        dict(B=3, C=5, H=64, W=64, dtype=jnp.bfloat16, use_dice=True,  tile=32),    # bf16 masks, 2-core split
        dict(B=4, C=4, H=512, W=512, dtype=jnp.float32, use_dice=True, tile=None),  # big: default 2 MiB blocks, even split
    ]

    for idx, c in enumerate(cases):
        key, k1, k2, k3, k4, k5, k6 = jax.random.split(key, 7)
        B, C, H, W = c["B"], c["C"], c["H"], c["W"]

        pred_mask = jax.random.normal(k1, (B, 1, H, W), jnp.float32).astype(c["dtype"])
        mask = (jax.random.uniform(k2, (B, 1, H, W)) > 0.5).astype(c["dtype"])
        pred_lab = jax.random.normal(k3, (B, C), jnp.float32)
        label = jax.random.randint(k4, (B,), 0, C)
        pred_its = jax.random.normal(k5, (B, 1), jnp.float32)
        intensity = (jax.random.uniform(k6, (B,)) > 0.5).astype(jnp.float32)

        out = multitask_loss(pred_mask, pred_lab, pred_its, mask, label, intensity,
                             use_dice=c["use_dice"], max_tile_rows=c["tile"])
        out = jax.block_until_ready(out)
        ref = multitask_loss_ref(pred_mask, pred_lab, pred_its, mask, label, intensity,
                                 use_dice=c["use_dice"])
        assert out.shape == (3,)
        assert jnp.allclose(out, ref, atol=1e-4, rtol=1e-4), (idx, out, ref)

    print("KERNEL_OK")
</pallas_src>

<mosaic_0001>
module attributes {stable_mosaic.version = 11 : i64} {
  func.func @_multitask_loss_kernel(%arg0: i32, %arg1: i32, %arg2: memref<4x128xf32, #tpu.memory_space<vmem>>, %arg3: memref<4x128xf32, #tpu.memory_space<vmem>>, %arg4: memref<2x4xf32, #tpu.memory_space<vmem>>, %arg5: memref<2x1xi32, #tpu.memory_space<vmem>>, %arg6: memref<2x1xf32, #tpu.memory_space<vmem>>, %arg7: memref<2x1xf32, #tpu.memory_space<vmem>>, %arg8: memref<1x8x128xf32, #tpu.memory_space<vmem>>, %arg9: memref<1x128xf32, #tpu.memory_space<vmem>>, %arg10: memref<1x128xf32, #tpu.memory_space<vmem>>) attributes {dimension_semantics = [#tpu.dimension_semantics<parallel>, #tpu.dimension_semantics<arbitrary>], iteration_bounds = array<i64: 1, 1>, scalar_prefetch = 0 : i64, scratch_operands = 2 : i64, tpu.core_type = #tpu.core_type<tc>, window_params = [{transform_indices = @transform_0, window_bounds = array<i64: 4, 128>}, {transform_indices = @transform_1, window_bounds = array<i64: 4, 128>}, {pipeline_mode = #tpu.pipeline_mode<synchronous>, transform_indices = @transform_2, window_bounds = array<i64: 2, 4>}, {pipeline_mode = #tpu.pipeline_mode<synchronous>, transform_indices = @transform_3, window_bounds = array<i64: 2, 1>}, {pipeline_mode = #tpu.pipeline_mode<synchronous>, transform_indices = @transform_4, window_bounds = array<i64: 2, 1>}, {pipeline_mode = #tpu.pipeline_mode<synchronous>, transform_indices = @transform_5, window_bounds = array<i64: 2, 1>}, {transform_indices = @transform_6, window_bounds = array<i64: 1, 8, 128>}]} {
    %c0_i32 = arith.constant 0 : i32
    %0 = arith.cmpi eq, %arg1, %c0_i32 : i32
    %1 = arith.extui %0 : i1 to i32
    %c0_i32_0 = arith.constant 0 : i32
    %2 = arith.cmpi ne, %1, %c0_i32_0 : i32
    scf.if %2 {
      %cst_18 = arith.constant 0.000000e+00 : f32
      %27 = vector.broadcast %cst_18 : f32 to vector<1x128xf32>
      %c0_19 = arith.constant 0 : index
      %c0_20 = arith.constant 0 : index
      %28 = vector.load %arg9[%c0_19, %c0_20] : memref<1x128xf32, #tpu.memory_space<vmem>>, vector<1x128xf32>
      tpu.vector_store %arg9[%c0_19, %c0_20], %27 {strides = array<i32>} : memref<1x128xf32, #tpu.memory_space<vmem>>, vector<1x128xf32>,
      %cst_21 = arith.constant 0.000000e+00 : f32
      %29 = vector.broadcast %cst_21 : f32 to vector<1x128xf32>
      %c0_22 = arith.constant 0 : index
      %c0_23 = arith.constant 0 : index
      %30 = vector.load %arg10[%c0_22, %c0_23] : memref<1x128xf32, #tpu.memory_space<vmem>>, vector<1x128xf32>
      tpu.vector_store %arg10[%c0_22, %c0_23], %29 {strides = array<i32>} : memref<1x128xf32, #tpu.memory_space<vmem>>, vector<1x128xf32>,
    } else {
    }
    %c0 = arith.constant 0 : index
    %c0_1 = arith.constant 0 : index
    %3 = vector.load %arg2[%c0, %c0_1] : memref<4x128xf32, #tpu.memory_space<vmem>>, vector<4x128xf32>
    %c0_2 = arith.constant 0 : index
    %c0_3 = arith.constant 0 : index
    %4 = vector.load %arg3[%c0_2, %c0_3] : memref<4x128xf32, #tpu.memory_space<vmem>>, vector<4x128xf32>
    %cst = arith.constant 5.000000e-01 : f32
    %5 = vector.broadcast %cst : f32 to vector<4x128xf32>
    %6 = arith.mulf %5, %3 : vector<4x128xf32>
    %7 = math.tanh %6 : vector<4x128xf32>
    %cst_4 = arith.constant 1.000000e+00 : f32
    %8 = vector.broadcast %cst_4 : f32 to vector<4x128xf32>
    %9 = arith.addf %8, %7 : vector<4x128xf32>
    %cst_5 = arith.constant 5.000000e-01 : f32
    %10 = vector.broadcast %cst_5 : f32 to vector<4x128xf32>
    %11 = arith.mulf %10, %9 : vector<4x128xf32>
    %12 = arith.mulf %11, %4 : vector<4x128xf32>
    %13 = arith.addf %11, %4 : vector<4x128xf32>
    %c0_6 = arith.constant 0 : index
    %c0_7 = arith.constant 0 : index
    %14 = vector.load %arg9[%c0_6, %c0_7] : memref<1x128xf32, #tpu.memory_space<vmem>>, vector<1x128xf32>
    %cst_8 = arith.constant dense<0.000000e+00> : vector<128xf32>
    %15 = vector.multi_reduction <add>, %12, %cst_8 [0] : vector<4x128xf32> to vector<128xf32>
    %16 = vector.shape_cast %15 : vector<128xf32> to vector<1x128xf32>
    %17 = arith.addf %14, %16 : vector<1x128xf32>
    %c0_9 = arith.constant 0 : index
    %c0_10 = arith.constant 0 : index
    %18 = vector.load %arg9[%c0_9, %c0_10] : memref<1x128xf32, #tpu.memory_space<vmem>>, vector<1x128xf32>
    tpu.vector_store %arg9[%c0_9, %c0_10], %17 {strides = array<i32>} : memref<1x128xf32, #tpu.memory_space<vmem>>, vector<1x128xf32>,
    %c0_11 = arith.constant 0 : index
    %c0_12 = arith.constant 0 : index
    %19 = vector.load %arg10[%c0_11, %c0_12] : memref<1x128xf32, #tpu.memory_space<vmem>>, vector<1x128xf32>
    %cst_13 = arith.constant dense<0.000000e+00> : vector<128xf32>
    %20 = vector.multi_reduction <add>, %13, %cst_13 [0] : vector<4x128xf32> to vector<128xf32>
    %21 = vector.shape_cast %20 : vector<128xf32> to vector<1x128xf32>
    %22 = arith.addf %19, %21 : vector<1x128xf32>
    %c0_14 = arith.constant 0 : index
    %c0_15 = arith.constant 0 : index
    %23 = vector.load %arg10[%c0_14, %c0_15] : memref<1x128xf32, #tpu.memory_space<vmem>>, vector<1x128xf32>
    tpu.vector_store %arg10[%c0_14, %c0_15], %22 {strides = array<i32>} : memref<1x128xf32, #tpu.memory_space<vmem>>, vector<1x128xf32>,
    %c0_i32_16 = arith.constant 0 : i32
    %24 = arith.cmpi eq, %arg1, %c0_i32_16 : i32
    %25 = arith.extui %24 : i1 to i32
    %c0_i32_17 = arith.constant 0 : i32
    %26 = arith.cmpi ne, %25, %c0_i32_17 : i32
    scf.if %26 {
      %c0_18 = arith.constant 0 : index
      %c0_19 = arith.constant 0 : index
      %27 = vector.load %arg4[%c0_18, %c0_19] : memref<2x4xf32, #tpu.memory_space<vmem>>, vector<2x4xf32>
      %cst_20 = arith.constant dense<0xFF800000> : vector<2xf32>
      %28 = vector.multi_reduction <maximumf>, %27, %cst_20 [1] : vector<2x4xf32> to vector<2xf32>
      %29 = vector.shape_cast %28 : vector<2xf32> to vector<2x1xf32>
      %30 = vector.broadcast %29 : vector<2x1xf32> to vector<2x4xf32>
      %31 = arith.subf %27, %30 : vector<2x4xf32>
      %32 = math.exp %31 : vector<2x4xf32>
      %cst_21 = arith.constant dense<0.000000e+00> : vector<2xf32>
      %33 = vector.multi_reduction <add>, %32, %cst_21 [1] : vector<2x4xf32> to vector<2xf32>
      %34 = vector.shape_cast %33 : vector<2xf32> to vector<2x1xf32>
      %35 = math.log %34 : vector<2x1xf32>
      %36 = arith.addf %29, %35 : vector<2x1xf32>
      %37 = tpu.iota {dimensions = array<i32: 1>} : vector<2x4xi32>
      %c0_22 = arith.constant 0 : index
      %c0_23 = arith.constant 0 : index
      %38 = vector.load %arg5[%c0_22, %c0_23] : memref<2x1xi32, #tpu.memory_space<vmem>>, vector<2x1xi32>
      %39 = vector.broadcast %38 : vector<2x1xi32> to vector<2x4xi32>
      %40 = arith.cmpi eq, %37, %39 : vector<2x4xi32>
      %41 = arith.extui %40 : vector<2x4xi1> to vector<2x4xi32>
      %42 = arith.sitofp %41 : vector<2x4xi32> to vector<2x4xf32>
      %43 = arith.mulf %42, %27 : vector<2x4xf32>
      %cst_24 = arith.constant dense<0.000000e+00> : vector<2xf32>
      %44 = vector.multi_reduction <add>, %43, %cst_24 [1] : vector<2x4xf32> to vector<2xf32>
      %45 = vector.shape_cast %44 : vector<2xf32> to vector<2x1xf32>
      %46 = arith.subf %36, %45 : vector<2x1xf32>
      %47 = vector.shape_cast %46 : vector<2x1xf32> to vector<1x2x1xf32>
      %cst_25 = arith.constant dense<0.000000e+00> : vector<1xf32>
      %48 = vector.multi_reduction <add>, %47, %cst_25 [1, 2] : vector<1x2x1xf32> to vector<1xf32>
      %49 = vector.shape_cast %48 : vector<1xf32> to vector<1x1x1xf32>
      %50 = vector.extract %49[0, 0, 0] : f32 from vector<1x1x1xf32>
      %cst_26 = arith.constant 2.000000e+00 : f32
      %51 = arith.divf %50, %cst_26 : f32
      %c0_27 = arith.constant 0 : index
      %c0_28 = arith.constant 0 : index
      %52 = vector.load %arg6[%c0_27, %c0_28] : memref<2x1xf32, #tpu.memory_space<vmem>>, vector<2x1xf32>
      %c0_29 = arith.constant 0 : index
      %c0_30 = arith.constant 0 : index
      %53 = vector.load %arg7[%c0_29, %c0_30] : memref<2x1xf32, #tpu.memory_space<vmem>>, vector<2x1xf32>
      %cst_31 = arith.constant 0.000000e+00 : f32
      %54 = vector.broadcast %cst_31 : f32 to vector<2x1xf32>
      %55 = arith.maximumf %52, %54 : vector<2x1xf32>
      %56 = arith.mulf %52, %53 : vector<2x1xf32>
      %57 = arith.subf %55, %56 : vector<2x1xf32>
      %58 = math.absf %52 : vector<2x1xf32>
      %cst_32 = arith.constant 0.000000e+00 : f32
      %59 = vector.broadcast %cst_32 : f32 to vector<2x1xf32>
      %60 = arith.subf %59, %58 : vector<2x1xf32>
      %61 = math.exp %60 : vector<2x1xf32>
      %62 = math.log1p %61 : vector<2x1xf32>
      %63 = arith.addf %57, %62 : vector<2x1xf32>
      %64 = vector.shape_cast %63 : vector<2x1xf32> to vector<1x2x1xf32>
      %cst_33 = arith.constant dense<0.000000e+00> : vector<1xf32>
      %65 = vector.multi_reduction <add>, %64, %cst_33 [1, 2] : vector<1x2x1xf32> to vector<1xf32>
      %66 = vector.shape_cast %65 : vector<1xf32> to vector<1x1x1xf32>
      %67 = vector.extract %66[0, 0, 0] : f32 from vector<1x1x1xf32>
      %cst_34 = arith.constant 2.000000e+00 : f32
      %68 = arith.divf %67, %cst_34 : f32
      %c0_35 = arith.constant 0 : index
      %c0_36 = arith.constant 0 : index
      %69 = vector.load %arg9[%c0_35, %c0_36] : memref<1x128xf32, #tpu.memory_space<vmem>>, vector<1x128xf32>
      %c0_37 = arith.constant 0 : index
      %c0_38 = arith.constant 0 : index
      %70 = vector.load %arg10[%c0_37, %c0_38] : memref<1x128xf32, #tpu.memory_space<vmem>>, vector<1x128xf32>
      %71 = vector.broadcast %51 : f32 to vector<1x128xf32>
      %72 = vector.broadcast %68 : f32 to vector<1x128xf32>
      %cst_39 = arith.constant 0.000000e+00 : f32
      %73 = vector.broadcast %cst_39 : f32 to vector<4x128xf32>
      %74 = tpu.concatenate %69, %70, %71, %72, %73 in 0 : vector<1x128xf32>, vector<1x128xf32>, vector<1x128xf32>, vector<1x128xf32>, vector<4x128xf32> -> vector<8x128xf32>
      %75 = vector.shape_cast %74 : vector<8x128xf32> to vector<1x8x128xf32>
      %c0_40 = arith.constant 0 : index
      %c0_41 = arith.constant 0 : index
      %c0_42 = arith.constant 0 : index
      %76 = vector.load %arg8[%c0_40, %c0_41, %c0_42] : memref<1x8x128xf32, #tpu.memory_space<vmem>>, vector<1x8x128xf32>
      tpu.vector_store %arg8[%c0_40, %c0_41, %c0_42], %75 {strides = array<i32>} : memref<1x8x128xf32, #tpu.memory_space<vmem>>, vector<1x8x128xf32>,
    } else {
    }
    return
  }
  func.func @transform_0(%arg0: i32, %arg1: i32) -> (i32, i32) {
    %c1_i32 = arith.constant 1 : i32
    %0 = arith.muli %arg0, %c1_i32 : i32
    %1 = arith.addi %0, %arg1 : i32
    %c0_i32 = arith.constant 0 : i32
    %c0_i32_0 = arith.constant 0 : i32
    return %1, %c0_i32 : i32, i32
  }
  func.func @transform_1(%arg0: i32, %arg1: i32) -> (i32, i32) {
    %c1_i32 = arith.constant 1 : i32
    %0 = arith.muli %arg0, %c1_i32 : i32
    %1 = arith.addi %0, %arg1 : i32
    %c0_i32 = arith.constant 0 : i32
    %c0_i32_0 = arith.constant 0 : i32
    return %1, %c0_i32 : i32, i32
  }
  func.func @transform_2(%arg0: i32, %arg1: i32) -> (i32, i32) {
    %c0_i32 = arith.constant 0 : i32
    %c0_i32_0 = arith.constant 0 : i32
    %c0_i32_1 = arith.constant 0 : i32
    return %c0_i32, %c0_i32_0 : i32, i32
  }
  func.func @transform_3(%arg0: i32, %arg1: i32) -> (i32, i32) {
    %c0_i32 = arith.constant 0 : i32
    %c0_i32_0 = arith.constant 0 : i32
    %c0_i32_1 = arith.constant 0 : i32
    return %c0_i32, %c0_i32_0 : i32, i32
  }
  func.func @transform_4(%arg0: i32, %arg1: i32) -> (i32, i32) {
    %c0_i32 = arith.constant 0 : i32
    %c0_i32_0 = arith.constant 0 : i32
    %c0_i32_1 = arith.constant 0 : i32
    return %c0_i32, %c0_i32_0 : i32, i32
  }
  func.func @transform_5(%arg0: i32, %arg1: i32) -> (i32, i32) {
    %c0_i32 = arith.constant 0 : i32
    %c0_i32_0 = arith.constant 0 : i32
    %c0_i32_1 = arith.constant 0 : i32
    return %c0_i32, %c0_i32_0 : i32, i32
  }
  func.func @transform_6(%arg0: i32, %arg1: i32) -> (i32, i32, i32) {
    %c0_i32 = arith.constant 0 : i32
    %c0_i32_0 = arith.constant 0 : i32
    %c0_i32_1 = arith.constant 0 : i32
    return %arg0, %c0_i32, %c0_i32_0 : i32, i32, i32
  }
}

</mosaic_0001>

<llo_original>
// kernel: tpu_custom_call.1
$region0: #{tpu_custom_call.1}
  #allocation0 [shape = 'u32[]', space=smem, size = 0x4, offset = 0x4, fixed_abs, tag = 'smem constant byte address 0x4 - core index']
  #allocation1 [shape = 'u32[72,128]{1,0:T(1,128)}', space=vmem, size = 0x9000, scoped, tag = 'internal scratch']
  #allocation2 [shape = 'f32[1,128]{1,0:T(1,128)}', space=vmem, size = 0x200, scoped, tag = 'scratch operand']
  #allocation3 [shape = 'f32[1,128]{1,0:T(1,128)}', space=vmem, size = 0x200, scoped, tag = 'scratch operand']
  %s0 = inlined_call_operand.vmem [shape: f32[4,128], index: 0, kind: input, shape index: {}]
  %s1 = inlined_call_operand.hbm [shape: f32[4,128], index: 1, kind: input, shape index: {}]
  %s2 = inlined_call_operand.vmem [shape: f32[2,4], index: 2, kind: input, shape index: {}]
  %s3 = inlined_call_operand.vmem [shape: s32[2,1], index: 3, kind: input, shape index: {}]
  %s4 = inlined_call_operand.vmem [shape: f32[2,1], index: 4, kind: input, shape index: {}]
  %s5 = inlined_call_operand.vmem [shape: f32[2,1], index: 5, kind: input, shape index: {}]
  %s6 = inlined_call_operand.hbm [shape: f32[1,8,128], index: 6, kind: output, shape index: {}]
  %s7 = sld [smem:[#allocation0]]
  $region46: #{tpu_custom_call.1} parent=0
    _
  %s9 = ssub.s32 1, %s7
  %s10 = scalar_select 0, %s9, %s7
  $region1: #{tpu_custom_call.1} parent=0
    #allocation4 [shape = 'u8[2048]{0}', space=vmem, size = 0x800, scoped, tag = 'input window, operand 1, single buffered']
    #allocation5 [shape = 's32[1]{0}', space=sflag, size = 0x4, scoped, tag = 'scoped memory for tpu_custom_call.1']
    #allocation6 [shape = 's32[1]{0}', space=sflag, size = 0x4, scoped, tag = 'scoped memory for tpu_custom_call.1']
    #allocation7 [shape = 'u8[4096]{0}', space=vmem, size = 0x1000, scoped, tag = 'output window, operand 0, single buffered']
    %11 = vsyncpa [#allocation5], 0
    %12 = vsyncpa [#allocation6], 0
    // Predicated region
    $region2: #{tpu_custom_call.1} parent=1 // pred_check
      _
    $region3: #{tpu_custom_call.1} parent=1 // pred_check_branch
      %14 = sbr.rel (0) target = $region5
    $region4: #{tpu_custom_call.1} parent=1 // pred_region
      %s15 = sadd.s32 0, 0
      %p16 = scmp.lt.s32.totalorder %s15, 0
      %s17 = scalar_select %p16, %s15, 0
      %s18 = smul.addr %s17, 4
      %s19 = scalar_lea.vmem %s0, %s18
      %s20 = sadd.s32 0, 0
    $region5: #{tpu_custom_call.1} parent=1 // pred_fallthru
      _
    // Predicated region
    $region6: #{tpu_custom_call.1} parent=1 // pred_check
      _
    $region7: #{tpu_custom_call.1} parent=1 // pred_check_branch
      %22 = sbr.rel (0) target = $region9
    $region8: #{tpu_custom_call.1} parent=1 // pred_region
      %s23 = sadd.s32 0, 0
      %25 = vsyncadd [#allocation5], 0
      %s26 = smul.addr %s23, 4
      %s27 = scalar_lea.hbm %s1, %s26
      %s29 = sshll.u32 %s27, 4
      %s30 = int_to_ptr.hbm [resolvable:$true] %s29
      %s31 = sshll.u32 [#allocation4], 4
      %s32 = int_to_ptr.vmem [resolvable:$true] %s31
      %34 = dma.hbm_to_vmem [thread:$0]  %s30, 64, %s32, [#allocation5]
    $region9: #{tpu_custom_call.1} parent=1 // pred_fallthru
      _
    // Predicated region
    $region10: #{tpu_custom_call.1} parent=1 // pred_check
      _
    $region11: #{tpu_custom_call.1} parent=1 // pred_check_branch
      %36 = sbr.rel (0) target = $region13
    $region12: #{tpu_custom_call.1} parent=1 // pred_region
      _
    $region13: #{tpu_custom_call.1} parent=1 // pred_fallthru
      _
    // Predicated region
    $region14: #{tpu_custom_call.1} parent=1 // pred_check
      _
    $region15: #{tpu_custom_call.1} parent=1 // pred_check_branch
      %38 = sbr.rel (0) target = $region17
    $region16: #{tpu_custom_call.1} parent=1 // pred_region
      _
    $region17: #{tpu_custom_call.1} parent=1 // pred_fallthru
      _
    // Predicated region
    $region18: #{tpu_custom_call.1} parent=1 // pred_check
      _
    $region19: #{tpu_custom_call.1} parent=1 // pred_check_branch
      %40 = sbr.rel (0) target = $region21
    $region20: #{tpu_custom_call.1} parent=1 // pred_region
      _
    $region21: #{tpu_custom_call.1} parent=1 // pred_fallthru
      _
    // Predicated region
    $region22: #{tpu_custom_call.1} parent=1 // pred_check
      _
    $region23: #{tpu_custom_call.1} parent=1 // pred_check_branch
      %42 = sbr.rel (0) target = $region25
    $region24: #{tpu_custom_call.1} parent=1 // pred_region
      _
    $region25: #{tpu_custom_call.1} parent=1 // pred_fallthru
      _
    // Predicated region
    $region26: #{tpu_custom_call.1} parent=1 // pred_check
      _
    $region27: #{tpu_custom_call.1} parent=1 // pred_check_branch
      %44 = sbr.rel (0) target = $region29
    $region28: #{tpu_custom_call.1} parent=1 // pred_region
      %46 = dma.done [#allocation5], 64
    $region29: #{tpu_custom_call.1} parent=1 // pred_fallthru
      _
    %s47 = sadd.s32 0, 0
    %p48 = scmp.lt.s32.totalorder %s47, 0
    %s49 = scalar_select %p48, %s47, 0
    %s50 = smul.addr %s49, 4
    %s51 = scalar_lea.vmem %s0, %s50
    %s52 = sadd.s32 0, 0
    %p53 = scmp.lt.s32.totalorder %s52, 0
    %s54 = scalar_select %p53, %s52, 0
    %s55 = smul.addr %s54, 4
    %s56 = scalar_lea.vmem %s0, %s55
    %s57 = sadd.s32 0, 0
    %s58 = sadd.s32 0, 0
    %p59 = scmp.eq.s32.totalorder 0, 0
    // Predicated region
    $region30: #{tpu_custom_call.1} parent=1 // pred_check
      %p60 = pneg %p59
    $region31: #{tpu_custom_call.1} parent=1 // pred_check_branch
      %62 = sbr.rel (%p60) target = $region33
    $region32: #{tpu_custom_call.1} parent=1 // pred_region
      %63 = vst [vmem:[#allocation2] sm:$0x1] 0.0
      %64 = vst [vmem:[#allocation3] sm:$0x1] 0.0
    $region33: #{tpu_custom_call.1} parent=1 // pred_fallthru
      _
    %v65 = vld [vmem:[%s56] sm:$0xf]
    %v66 = vld [vmem:[#allocation4] sm:$0xf]
    %v67 = vmul.f32 %v65, 0.5
    %v68 = vtanh.pop %v67
    %v69 = vadd.f32 %v68, 1.0
    %v70 = vmul.f32 %v69, 0.5
    %v71 = vmul.f32 %v70, %v66
    %v72 = vadd.f32 %v70, %v66
    %v73 = vld [vmem:[#allocation2] sm:$0x1]
    %vm74 = vcmask 1043456
    %v75 = vsel %vm74, %v71, 0.0
    %v76 = vrot.slane %v75, 4
    %v77 = vadd.f32 %v75, %v76
    %v78 = vrot.slane %v77, 2
    %v79 = vadd.f32 %v77, %v78
    %v80 = vrot.slane %v79, 1
    %v81 = vadd.f32 %v79, %v80
    %v82 = vadd.f32 %v73, %v81
    %83 = vst [vmem:[#allocation2] sm:$0x1] %v82
    %v84 = vld [vmem:[#allocation3] sm:$0x1]
    %v85 = vsel %vm74, %v72, 0.0
    %v86 = vrot.slane %v85, 4
    %v87 = vadd.f32 %v85, %v86
    %v88 = vrot.slane %v87, 2
    %v89 = vadd.f32 %v87, %v88
    %v90 = vrot.slane %v89, 1
    %v91 = vadd.f32 %v89, %v90
    %v92 = vadd.f32 %v84, %v91
    %93 = vst [vmem:[#allocation3] sm:$0x1] %v92
    // Predicated region
    $region34: #{tpu_custom_call.1} parent=1 // pred_check
      %p94 = pneg %p59
    $region35: #{tpu_custom_call.1} parent=1 // pred_check_branch
      %96 = sbr.rel (%p94) target = $region37
    $region36: #{tpu_custom_call.1} parent=1 // pred_region
      %v97 = vld [vmem:[%s2] sm:$0x3]
      %vm98 = vcmask 25600
      %v99 = vsel %vm98, %v97, -inf
      %100 = vmax.xlane.f32.xlu0 %v99
      %v101 = vpop.xlane.xlu0 %100
      %v102 = vsub.f32 %v97, %v101
      %v103 = vmul.f32 %v102, 1.442695
      %v104 = vpow.pop %v103
      %v105 = vsel %vm98, %v104, 0.0
      %106 = vadd.xlane.f32.xlu0 %v105
      %v107 = vpop.xlane.xlu0 %106
      %v108 = vlog2.pop %v107
      %v109 = vmul.f32 %v108, 0.6931472
      %v110 = vadd.f32 %v101, %v109
      %v111 = vlaneseq
      %v112 = vand.u32 %v111, 127
      %v113 = vld [vmem:[%s3] sm:$0x3]
      %114 = vset.pattern.permute.xlu0 0
      %115 = vperm.xlu0 %114, %v113
      %v116 = vpop.permute.xlu0 %115
      %vm117 = vcmp.eq.s32.totalorder %v112, %v116
      %v118 = vsel %vm117, 1, 0
      %v119 = vcvt.s32.f32 %v118
      %v120 = vmul.f32 %v119, %v97
      %v121 = vsel %vm98, %v120, 0.0
      %122 = vadd.xlane.f32.xlu0 %v121
      %v123 = vpop.xlane.xlu0 %122
      %v124 = vsub.f32 %v110, %v123
      %vm125 = vcmask 1024
      %v126 = vsel %vm125, %v124, 0.0
      %127 = vadd.xlane.f32.xlu0 %v126
      %v128 = vpop.xlane.xlu0 %127
      %v129 = vrot.slane %v128, 4
      %v130 = vadd.f32 %v128, %v129
      %v131 = vrot.slane %v130, 2
      %v132 = vadd.f32 %v130, %v131
      %v133 = vrot.slane %v132, 1
      %v134 = vadd.f32 %v132, %v133
      %s135 = vtos %v134
      %v136 = vrcp.pop 2.0
      %v137 = vmul.f32 2.0, %v136
      %v138 = vsub.f32 1.0, %v137
      %v139 = vmul.f32 %v136, %v138
      %v140 = vadd.f32 %v136, %v139
      %vm141 = vweird.f32 %v136
      %v142 = vsel %vm141, %v136, %v140
      %s143 = vtos %v142
      %s144 = smul.f32 %s135, %s143
      %v145 = vld [vmem:[%s4] sm:$0x3]
      %v146 = vld [vmem:[%s5] sm:$0x3]
      %v147 = vmax.f32 %v145, 0.0
      %v148 = vmul.f32 %v145, %v146
      %v149 = vsub.f32 %v147, %v148
      %v150 = vand.u32 2147483647, %v145
      %v151 = vsub.f32 0.0, %v150
      %v152 = vmul.f32 %v151, 1.442695
      %v153 = vpow.pop %v152
      %v154 = vadd.f32 %v153, 1.0
      %v155 = vlog2.pop %v154
      %v156 = vmul.f32 %v155, 0.6931472
      %v157 = vmul.f32 -0.5, %v153
      %v158 = vadd.f32 %v157, 1.0
      %v159 = vmul.f32 %v158, %v153
      %v160 = vand.u32 2147483647, %v153
      %vm161 = vcmp.lt.f32.partialorder %v160, 0.0004427343
      %v162 = vsel %vm161, %v159, %v156
      %v163 = vadd.f32 %v149, %v162
      %v164 = vsel %vm125, %v163, 0.0
      %165 = vadd.xlane.f32.xlu0 %v164
      %v166 = vpop.xlane.xlu0 %165
      %v167 = vrot.slane %v166, 4
      %v168 = vadd.f32 %v166, %v167
      %v169 = vrot.slane %v168, 2
      %v170 = vadd.f32 %v168, %v169
      %v171 = vrot.slane %v170, 1
      %v172 = vadd.f32 %v170, %v171
      %s173 = vtos %v172
      %v174 = vrcp.pop 2.0
      %v175 = vmul.f32 2.0, %v174
      %v176 = vsub.f32 1.0, %v175
      %v177 = vmul.f32 %v174, %v176
      %v178 = vadd.f32 %v174, %v177
      %vm179 = vweird.f32 %v174
      %v180 = vsel %vm179, %v174, %v178
      %s181 = vtos %v180
      %s182 = smul.f32 %s173, %s181
      %v183 = vld [vmem:[#allocation2] sm:$0x1]
      %v184 = vld [vmem:[#allocation3] sm:$0x1]
      %v185 = vstv %s144
      %v186 = vstv %s182
      %v188 = vperm.slane %v184, 0
      %vm190 = vcmask 1040384
      %v191 = vsel %vm190, %v183, %v188
      %vm192 = vcmask 1041408
      %v193 = vsel %vm192, %v191, %v185
      %vm194 = vcmask 1042432
      %v195 = vsel %vm194, %v193, %v186
      %v196 = vsel %vm74, %v195, 0.0
      %197 = vst [vmem:[#allocation7] sm:$0xff] %v196
    $region37: #{tpu_custom_call.1} parent=1 // pred_fallthru
      _
    // Predicated region
    $region38: #{tpu_custom_call.1} parent=1 // pred_check
      _
    $region39: #{tpu_custom_call.1} parent=1 // pred_check_branch
      %199 = sbr.rel (0) target = $region41
    $region40: #{tpu_custom_call.1} parent=1 // pred_region
      %201 = vsyncadd [#allocation6], 0
      %s203 = sshll.u32 [#allocation7], 4
      %s204 = int_to_ptr.vmem [resolvable:$true] %s203
      %s205 = sshll.u32 %s6, 4
      %s206 = int_to_ptr.hbm [resolvable:$true] %s205
      %208 = dma.vmem_to_hbm [thread:$0]  %s204, 128, %s206, [#allocation6]
    $region41: #{tpu_custom_call.1} parent=1 // pred_fallthru
      _
    // Predicated region
    $region42: #{tpu_custom_call.1} parent=1 // pred_check
      _
    $region43: #{tpu_custom_call.1} parent=1 // pred_check_branch
      %210 = sbr.rel (0) target = $region45
    $region44: #{tpu_custom_call.1} parent=1 // pred_region
      %212 = dma.done [#allocation6], 128
    $region45: #{tpu_custom_call.1} parent=1 // pred_fallthru
      _
    %213 = vsyncpa [#allocation5], 1
    %214 = vsyncpa [#allocation6], 1

</llo_original>
